<compile_context>
chip_gen: v5e
topology: v5e:2x2
jax: 0.10.0
libtpu: 0.0.40
codegen_flags: <defaults>
</compile_context>

<pallas_src>
import math

import jax
import jax.numpy as jnp
from jax.experimental import pallas as pl
from jax.experimental.pallas import tpu as pltpu


def ffn_kernel(x_ref, w1_ref, b1_ref, w2_ref, b2_ref, o_ref, acc_ref):
    """One (row-tile, d_ff-tile) step of  relu(x@W1 + b1) @ W2 + b2."""
    j = pl.program_id(1)

    @pl.when(j == 0)
    def _():
        acc_ref[...] = jnp.zeros_like(acc_ref)

    # First matmul (MXU, bf16 in / f32 out), bias + ReLU in f32.
    h = jnp.dot(x_ref[...], w1_ref[...], preferred_element_type=jnp.float32)
    h = jnp.maximum(h + b1_ref[...], 0.0)

    # Second matmul: contract this d_ff tile, accumulate in f32 scratch.
    acc_ref[...] += jnp.dot(
        h.astype(w2_ref.dtype), w2_ref[...], preferred_element_type=jnp.float32
    )

    @pl.when(j == pl.num_programs(1) - 1)
    def _():
        o_ref[...] = (acc_ref[...] + b2_ref[...]).astype(o_ref.dtype)


def _pick_tile(total, target, align):
    """Largest multiple of `align` that divides `total` and is <= target,
    falling back to the full extent (block == full dim is always legal)."""
    if total <= target:
        return total
    t = (target // align) * align
    while t >= align:
        if total % t == 0:
            return t
        t -= align
    return total


def pointwise_ffn(x, w1, b1, w2, b2, *, compute_dtype=jnp.bfloat16):
    """x: (B, S, d_model); w1: (d_model, d_ff); w2: (d_ff, d_model)."""
    B, S, D = x.shape
    d_ff = w1.shape[1]
    rows = B * S

    # Row tile: aim for >=256 rows per step (fills MXU M dim), multiple of 8.
    TR = _pick_tile(rows, 256, 8)
    # d_ff tile: keep weight blocks bounded; multiple of 128 (lane dim).
    TF = _pick_tile(d_ff, 512, 128)

    x2 = x.reshape(rows, D).astype(compute_dtype)
    w1c = w1.astype(compute_dtype)
    w2c = w2.astype(compute_dtype)
    b1r = b1.reshape(1, d_ff).astype(jnp.float32)
    b2r = b2.reshape(1, D).astype(jnp.float32)

    grid = (rows // TR, d_ff // TF)

    # VMEM budget: double-buffered blocks + accumulator, clamped for v7x (64 MiB).
    cb = jnp.dtype(compute_dtype).itemsize
    blk_bytes = (
        2 * TR * D * cb          # x tile
        + 2 * D * TF * cb        # w1 tile
        + 2 * TF * 4             # b1 tile (f32)
        + 2 * TF * D * cb        # w2 tile
        + 2 * D * 4              # b2 tile (f32)
        + 2 * TR * D * x.dtype.itemsize  # out tile
        + TR * D * 4             # f32 accumulator
    )
    vmem_limit = int(min(max(2 * blk_bytes, 4 << 20), 64 << 20))

    return pl.pallas_call(
        ffn_kernel,
        out_shape=jax.ShapeDtypeStruct((rows, D), x.dtype),
        grid_spec=pltpu.PrefetchScalarGridSpec(
            num_scalar_prefetch=0,
            grid=grid,
            in_specs=[
                pl.BlockSpec((TR, D), lambda i, j: (i, 0)),   # x rows
                pl.BlockSpec((D, TF), lambda i, j: (0, j)),   # w1 d_ff tile
                pl.BlockSpec((1, TF), lambda i, j: (0, j)),   # b1 d_ff tile
                pl.BlockSpec((TF, D), lambda i, j: (j, 0)),   # w2 d_ff tile
                pl.BlockSpec((1, D), lambda i, j: (0, 0)),    # b2 (constant)
            ],
            out_specs=pl.BlockSpec((TR, D), lambda i, j: (i, 0)),
            scratch_shapes=[pltpu.VMEM((TR, D), jnp.float32)],
        ),
        compiler_params=pltpu.CompilerParams(
            dimension_semantics=("parallel", "arbitrary"),
            vmem_limit_bytes=vmem_limit,
        ),
    )(x2, w1c, b1r, w2c, b2r).reshape(B, S, D)


def init_params(key, d_model, d_ff):
    """Matches torch.nn.Linear default init; weights stored (in, out)."""
    def lin(k, fan_in, fan_out):
        bound = 1.0 / math.sqrt(fan_in)
        kw, kb = jax.random.split(k)
        w = jax.random.uniform(kw, (fan_in, fan_out), jnp.float32, -bound, bound)
        b = jax.random.uniform(kb, (fan_out,), jnp.float32, -bound, bound)
        return w, b

    k1, k2 = jax.random.split(key)
    w1, b1 = lin(k1, d_model, d_ff)
    w2, b2 = lin(k2, d_ff, d_model)
    return w1, b1, w2, b2


def reference_forward(x, w1, b1, w2, b2, compute_dtype=jnp.bfloat16):
    # Pure-JAX reference with the same bf16-matmul / f32-accumulate recipe
    # (dropout = identity in eval mode).
    xc = x.astype(compute_dtype)
    h = jnp.dot(xc, w1.astype(compute_dtype),
                preferred_element_type=jnp.float32) + b1
    h = jnp.maximum(h, 0.0)
    out = jnp.dot(h.astype(compute_dtype), w2.astype(compute_dtype),
                  preferred_element_type=jnp.float32) + b2
    return out.astype(x.dtype)


if __name__ == "__main__":
    batch = 2
    seq = 8
    d_model = 32
    d_ff = 64
    # dropout_prob is irrelevant in eval-mode forward (identity).

    key = jax.random.PRNGKey(0)
    kx, kp = jax.random.split(key)
    x = jax.random.normal(kx, (batch, seq, d_model), jnp.float32)
    w1, b1, w2, b2 = init_params(kp, d_model, d_ff)

    out = pointwise_ffn(x, w1, b1, w2, b2)
    out = jax.block_until_ready(out)

    ref = reference_forward(x, w1, b1, w2, b2)
    assert out.shape == (batch, seq, d_model)
    assert jnp.allclose(out, ref, atol=2e-2, rtol=2e-2), "mismatch vs JAX reference"

    print("KERNEL_OK")
</pallas_src>

<mosaic_0001>
module attributes {stable_mosaic.version = 11 : i64} {
  func.func @ffn_kernel(%arg0: i32, %arg1: i32, %arg2: memref<16x32xbf16, #tpu.memory_space<vmem>>, %arg3: memref<32x64xbf16, #tpu.memory_space<vmem>>, %arg4: memref<1x64xf32, #tpu.memory_space<vmem>>, %arg5: memref<64x32xbf16, #tpu.memory_space<vmem>>, %arg6: memref<1x32xf32, #tpu.memory_space<vmem>>, %arg7: memref<16x32xf32, #tpu.memory_space<vmem>>, %arg8: memref<16x32xf32, #tpu.memory_space<vmem>>) attributes {dimension_semantics = [#tpu.dimension_semantics<parallel>, #tpu.dimension_semantics<arbitrary>], iteration_bounds = array<i64: 1, 1>, scalar_prefetch = 0 : i64, scratch_operands = 1 : i64, tpu.core_type = #tpu.core_type<tc>, window_params = [{transform_indices = @transform_0, window_bounds = array<i64: 16, 32>}, {transform_indices = @transform_1, window_bounds = array<i64: 32, 64>}, {transform_indices = @transform_2, window_bounds = array<i64: 1, 64>}, {transform_indices = @transform_3, window_bounds = array<i64: 64, 32>}, {pipeline_mode = #tpu.pipeline_mode<synchronous>, transform_indices = @transform_4, window_bounds = array<i64: 1, 32>}, {transform_indices = @transform_5, window_bounds = array<i64: 16, 32>}]} {
    %c0_i32 = arith.constant 0 : i32
    %0 = arith.cmpi eq, %arg1, %c0_i32 : i32
    %1 = arith.extui %0 : i1 to i32
    %c0_i32_0 = arith.constant 0 : i32
    %2 = arith.cmpi ne, %1, %c0_i32_0 : i32
    scf.if %2 {
      %cst_16 = arith.constant 0.000000e+00 : f32
      %20 = vector.broadcast %cst_16 : f32 to vector<16x32xf32>
      %c0_17 = arith.constant 0 : index
      %c0_18 = arith.constant 0 : index
      %21 = vector.load %arg8[%c0_17, %c0_18] : memref<16x32xf32, #tpu.memory_space<vmem>>, vector<16x32xf32>
      tpu.vector_store %arg8[%c0_17, %c0_18], %20 {strides = array<i32>} : memref<16x32xf32, #tpu.memory_space<vmem>>, vector<16x32xf32>,
    } else {
    }
    %c0 = arith.constant 0 : index
    %c0_1 = arith.constant 0 : index
    %3 = vector.load %arg2[%c0, %c0_1] : memref<16x32xbf16, #tpu.memory_space<vmem>>, vector<16x32xbf16>
    %c0_2 = arith.constant 0 : index
    %c0_3 = arith.constant 0 : index
    %4 = vector.load %arg3[%c0_2, %c0_3] : memref<32x64xbf16, #tpu.memory_space<vmem>>, vector<32x64xbf16>
    %cst = arith.constant dense<0.000000e+00> : vector<16x64xf32>
    %5 = tpu.matmul %3, %4, %cst {dimension_numbers = #tpu.dot_dimension_numbers<[1], [0], [0], [1], [0, 0, 1, 1], [], []>} : vector<16x32xbf16>, vector<32x64xbf16>, vector<16x64xf32> -> vector<16x64xf32>
    %c0_4 = arith.constant 0 : index
    %c0_5 = arith.constant 0 : index
    %6 = vector.load %arg4[%c0_4, %c0_5] : memref<1x64xf32, #tpu.memory_space<vmem>>, vector<1x64xf32>
    %7 = vector.broadcast %6 : vector<1x64xf32> to vector<16x64xf32>
    %8 = arith.addf %5, %7 : vector<16x64xf32>
    %cst_6 = arith.constant 0.000000e+00 : f32
    %9 = vector.broadcast %cst_6 : f32 to vector<16x64xf32>
    %10 = arith.maximumf %8, %9 : vector<16x64xf32>
    %c0_7 = arith.constant 0 : index
    %c0_8 = arith.constant 0 : index
    %11 = vector.load %arg8[%c0_7, %c0_8] : memref<16x32xf32, #tpu.memory_space<vmem>>, vector<16x32xf32>
    %12 = arith.truncf %10 : vector<16x64xf32> to vector<16x64xbf16>
    %c0_9 = arith.constant 0 : index
    %c0_10 = arith.constant 0 : index
    %13 = vector.load %arg5[%c0_9, %c0_10] : memref<64x32xbf16, #tpu.memory_space<vmem>>, vector<64x32xbf16>
    %cst_11 = arith.constant dense<0.000000e+00> : vector<16x32xf32>
    %14 = tpu.matmul %12, %13, %cst_11 {dimension_numbers = #tpu.dot_dimension_numbers<[1], [0], [0], [1], [0, 0, 1, 1], [], []>} : vector<16x64xbf16>, vector<64x32xbf16>, vector<16x32xf32> -> vector<16x32xf32>
    %15 = arith.addf %11, %14 : vector<16x32xf32>
    %c0_12 = arith.constant 0 : index
    %c0_13 = arith.constant 0 : index
    %16 = vector.load %arg8[%c0_12, %c0_13] : memref<16x32xf32, #tpu.memory_space<vmem>>, vector<16x32xf32>
    tpu.vector_store %arg8[%c0_12, %c0_13], %15 {strides = array<i32>} : memref<16x32xf32, #tpu.memory_space<vmem>>, vector<16x32xf32>,
    %c0_i32_14 = arith.constant 0 : i32
    %17 = arith.cmpi eq, %arg1, %c0_i32_14 : i32
    %18 = arith.extui %17 : i1 to i32
    %c0_i32_15 = arith.constant 0 : i32
    %19 = arith.cmpi ne, %18, %c0_i32_15 : i32
    scf.if %19 {
      %c0_16 = arith.constant 0 : index
      %c0_17 = arith.constant 0 : index
      %20 = vector.load %arg8[%c0_16, %c0_17] : memref<16x32xf32, #tpu.memory_space<vmem>>, vector<16x32xf32>
      %c0_18 = arith.constant 0 : index
      %c0_19 = arith.constant 0 : index
      %21 = vector.load %arg6[%c0_18, %c0_19] : memref<1x32xf32, #tpu.memory_space<vmem>>, vector<1x32xf32>
      %22 = vector.broadcast %21 : vector<1x32xf32> to vector<16x32xf32>
      %23 = arith.addf %20, %22 : vector<16x32xf32>
      %c0_20 = arith.constant 0 : index
      %c0_21 = arith.constant 0 : index
      %24 = vector.load %arg7[%c0_20, %c0_21] : memref<16x32xf32, #tpu.memory_space<vmem>>, vector<16x32xf32>
      tpu.vector_store %arg7[%c0_20, %c0_21], %23 {strides = array<i32>} : memref<16x32xf32, #tpu.memory_space<vmem>>, vector<16x32xf32>,
    } else {
    }
    return
  }
  func.func @transform_0(%arg0: i32, %arg1: i32) -> (i32, i32) {
    %c0_i32 = arith.constant 0 : i32
    %c0_i32_0 = arith.constant 0 : i32
    return %arg0, %c0_i32 : i32, i32
  }
  func.func @transform_1(%arg0: i32, %arg1: i32) -> (i32, i32) {
    %c0_i32 = arith.constant 0 : i32
    %c0_i32_0 = arith.constant 0 : i32
    return %c0_i32, %arg1 : i32, i32
  }
  func.func @transform_2(%arg0: i32, %arg1: i32) -> (i32, i32) {
    %c0_i32 = arith.constant 0 : i32
    %c0_i32_0 = arith.constant 0 : i32
    return %c0_i32, %arg1 : i32, i32
  }
  func.func @transform_3(%arg0: i32, %arg1: i32) -> (i32, i32) {
    %c0_i32 = arith.constant 0 : i32
    %c0_i32_0 = arith.constant 0 : i32
    return %arg1, %c0_i32 : i32, i32
  }
  func.func @transform_4(%arg0: i32, %arg1: i32) -> (i32, i32) {
    %c0_i32 = arith.constant 0 : i32
    %c0_i32_0 = arith.constant 0 : i32
    %c0_i32_1 = arith.constant 0 : i32
    return %c0_i32, %c0_i32_0 : i32, i32
  }
  func.func @transform_5(%arg0: i32, %arg1: i32) -> (i32, i32) {
    %c0_i32 = arith.constant 0 : i32
    %c0_i32_0 = arith.constant 0 : i32
    return %arg0, %c0_i32 : i32, i32
  }
}

</mosaic_0001>

<llo_original>
// kernel: tpu_custom_call.1
$region0: #{tpu_custom_call.1}
  #allocation0 [shape = 'u32[]', space=smem, size = 0x4, offset = 0x4, fixed_abs, tag = 'smem constant byte address 0x4 - core index']
  #allocation1 [shape = 'u32[72,128]{1,0:T(1,128)}', space=vmem, size = 0x9000, scoped, tag = 'internal scratch']
  #allocation2 [shape = 'f32[16,32]{1,0:T(8,128)}', space=vmem, size = 0x2000, scoped, tag = 'scratch operand']
  %s0 = inlined_call_operand.vmem [shape: bf16[16,32], index: 0, kind: input, shape index: {}]
  %s1 = inlined_call_operand.vmem [shape: bf16[32,64], index: 1, kind: input, shape index: {}]
  %s2 = inlined_call_operand.vmem [shape: f32[1,64], index: 2, kind: input, shape index: {}]
  %s3 = inlined_call_operand.vmem [shape: bf16[64,32], index: 3, kind: input, shape index: {}]
  %s4 = inlined_call_operand.vmem [shape: f32[1,32], index: 4, kind: input, shape index: {}]
  %s5 = inlined_call_operand.hbm [shape: f32[16,32], index: 5, kind: output, shape index: {}]
  %s6 = sld [smem:[#allocation0]]
  $region38: #{tpu_custom_call.1} parent=0
    _
  %s8 = ssub.s32 1, %s6
  %s9 = scalar_select 0, %s8, %s6
  $region1: #{tpu_custom_call.1} parent=0
    #allocation3 [shape = 'u8[8192]{0}', space=vmem, size = 0x2000, scoped, tag = 'output window, operand 0, single buffered']
    #allocation4 [shape = 's32[1]{0}', space=sflag, size = 0x4, scoped, tag = 'scoped memory for tpu_custom_call.1']
    %10 = vsyncpa [#allocation4], 0
    // Predicated region
    $region2: #{tpu_custom_call.1} parent=1 // pred_check
      _
    $region3: #{tpu_custom_call.1} parent=1 // pred_check_branch
      %12 = sbr.rel (0) target = $region5
    $region4: #{tpu_custom_call.1} parent=1 // pred_region
      _
    $region5: #{tpu_custom_call.1} parent=1 // pred_fallthru
      _
    // Predicated region
    $region6: #{tpu_custom_call.1} parent=1 // pred_check
      _
    $region7: #{tpu_custom_call.1} parent=1 // pred_check_branch
      %14 = sbr.rel (0) target = $region9
    $region8: #{tpu_custom_call.1} parent=1 // pred_region
      _
    $region9: #{tpu_custom_call.1} parent=1 // pred_fallthru
      _
    // Predicated region
    $region10: #{tpu_custom_call.1} parent=1 // pred_check
      _
    $region11: #{tpu_custom_call.1} parent=1 // pred_check_branch
      %16 = sbr.rel (0) target = $region13
    $region12: #{tpu_custom_call.1} parent=1 // pred_region
      _
    $region13: #{tpu_custom_call.1} parent=1 // pred_fallthru
      _
    // Predicated region
    $region14: #{tpu_custom_call.1} parent=1 // pred_check
      _
    $region15: #{tpu_custom_call.1} parent=1 // pred_check_branch
      %18 = sbr.rel (0) target = $region17
    $region16: #{tpu_custom_call.1} parent=1 // pred_region
      _
    $region17: #{tpu_custom_call.1} parent=1 // pred_fallthru
      _
    // Predicated region
    $region18: #{tpu_custom_call.1} parent=1 // pred_check
      _
    $region19: #{tpu_custom_call.1} parent=1 // pred_check_branch
      %20 = sbr.rel (0) target = $region21
    $region20: #{tpu_custom_call.1} parent=1 // pred_region
      _
    $region21: #{tpu_custom_call.1} parent=1 // pred_fallthru
      _
    %p22 = scmp.eq.s32.totalorder 0, 0
    // Predicated region
    $region22: #{tpu_custom_call.1} parent=1 // pred_check
      %p23 = pneg %p22
    $region23: #{tpu_custom_call.1} parent=1 // pred_check_branch
      %25 = sbr.rel (%p23) target = $region25
    $region24: #{tpu_custom_call.1} parent=1 // pred_region
      %vm26 = vcmask 261120
      %27 = vst.msk [vmem:[#allocation2] sm:$0xff] %vm26, 0.0
      %28 = vst.msk [vmem:[#allocation2 + $0x8] sm:$0xff] %vm26, 0.0
    $region25: #{tpu_custom_call.1} parent=1 // pred_fallthru
      _
    %v29 = vld [vmem:[%s0] sm:$0xf]
    %v30 = vld [vmem:[%s0 + $0x4] sm:$0xf]
    %v31 = vld [vmem:[%s1] sm:$0xf]
    %v32 = vld [vmem:[%s1 + $0x4] sm:$0xf]
    %v33 = vld [vmem:[%s1 + $0x8] sm:$0xf]
    %v34 = vld [vmem:[%s1 + $0xc] sm:$0xf]
    %v35 = vld [vmem:[%s2] sm:$0x1]
    %v37 = vperm.slane %v35, 0
    %v41 = vunpack.c.l.b16 %v29
    %v42 = vunpack.c.l.b16 %v30
    %v43 = vpack.c.b16 %v42, %v41
    %v48 = vunpack.c.l.b16 %v31
    %v49 = vunpack.c.l.b16 %v32
    %v50 = vunpack.c.l.b16 %v33
    %v51 = vunpack.c.l.b16 %v34
    %v52 = vpack.c.b16 %v49, %v48
    %v53 = vpack.c.b16 %v51, %v50
    %vm56 = vcmask 261120
    %v58 = vsel %vm56, %v43, 0
    %60 = vmatpush.bf16.msra.mxu0 0
    %61 = vmatpush.bf16.msra.mxu0 0
    %62 = vmatpush.bf16.msra.mxu0 0
    %63 = vmatpush.bf16.msra.mxu0 0
    %64 = vmatpush.bf16.msra.mxu0 0
    %65 = vmatpush.bf16.msra.mxu0 0
    %66 = vmatpush.bf16.msra.mxu0 %v53
    %67 = vmatpush.bf16.msra.mxu0 %v52
    %68 = vmatmul.bf16.gmra.mxu0 %v58
    %v69 = vpop.f32.mrf.mxu0
    %v70 = vadd.f32 %v37, %v69
    %v71 = vpop.f32.mrf.mxu0
    %v72 = vadd.f32 %v37, %v71
    %73 = vdwg.mxu0
    %v74 = vmax.f32 %v70, 0.0
    %v75 = vmax.f32 %v72, 0.0
    %v76 = vld [vmem:[#allocation2] sm:$0xff]
    %v77 = vld [vmem:[#allocation2 + $0x8] sm:$0xff]
    %v78 = vpack.c.bf16 %v75, %v74
    %v79 = vld [vmem:[%s3] sm:$0xf]
    %v80 = vld [vmem:[%s3 + $0x4] sm:$0xf]
    %v81 = vld [vmem:[%s3 + $0x8] sm:$0xf]
    %v82 = vld [vmem:[%s3 + $0xc] sm:$0xf]
    %v83 = vld [vmem:[%s3 + $0x10] sm:$0xf]
    %v84 = vld [vmem:[%s3 + $0x14] sm:$0xf]
    %v85 = vld [vmem:[%s3 + $0x18] sm:$0xf]
    %v86 = vld [vmem:[%s3 + $0x1c] sm:$0xf]
    %v95 = vunpack.c.l.b16 %v79
    %v96 = vunpack.c.l.b16 %v80
    %v97 = vunpack.c.l.b16 %v81
    %v98 = vunpack.c.l.b16 %v82
    %v99 = vunpack.c.l.b16 %v83
    %v100 = vunpack.c.l.b16 %v84
    %v101 = vunpack.c.l.b16 %v85
    %v102 = vunpack.c.l.b16 %v86
    %v103 = vpack.c.b16 %v96, %v95
    %v104 = vpack.c.b16 %v98, %v97
    %v105 = vpack.c.b16 %v100, %v99
    %v106 = vpack.c.b16 %v102, %v101
    %vm111 = vcmask 523264
    %v113 = vsel %vm111, %v78, 0
    %115 = vmatpush.bf16.msra.mxu0 0
    %116 = vmatpush.bf16.msra.mxu0 0
    %117 = vmatpush.bf16.msra.mxu0 0
    %118 = vmatpush.bf16.msra.mxu0 0
    %119 = vmatpush.bf16.msra.mxu0 %v106
    %120 = vmatpush.bf16.msra.mxu0 %v105
    %121 = vmatpush.bf16.msra.mxu0 %v104
    %122 = vmatpush.bf16.msra.mxu0 %v103
    %123 = vmatmul.bf16.gmra.mxu0 %v113
    %v124 = vpop.f32.mrf.mxu0
    %v125 = vadd.f32 0.0, %v124
    %v126 = vpop.f32.mrf.mxu0
    %v127 = vadd.f32 0.0, %v126
    %128 = vdwg.mxu0
    %v129 = vadd.f32 %v76, %v125
    %v130 = vadd.f32 %v77, %v127
    %131 = vst.msk [vmem:[#allocation2] sm:$0xff] %vm56, %v129
    %132 = vst.msk [vmem:[#allocation2 + $0x8] sm:$0xff] %vm56, %v130
    // Predicated region
    $region26: #{tpu_custom_call.1} parent=1 // pred_check
      %p133 = pneg %p22
    $region27: #{tpu_custom_call.1} parent=1 // pred_check_branch
      %135 = sbr.rel (%p133) target = $region29
    $region28: #{tpu_custom_call.1} parent=1 // pred_region
      %v136 = vld [vmem:[#allocation2] sm:$0xff]
      %v137 = vld [vmem:[#allocation2 + $0x8] sm:$0xff]
      %v138 = vld [vmem:[%s4] sm:$0x1]
      %v140 = vperm.slane %v138, 0
      %v142 = vadd.f32 %v136, %v140
      %v143 = vadd.f32 %v137, %v140
      %144 = vst.msk [vmem:[#allocation3] sm:$0xff] %vm56, %v142
      %145 = vst.msk [vmem:[#allocation3 + $0x8] sm:$0xff] %vm56, %v143
    $region29: #{tpu_custom_call.1} parent=1 // pred_fallthru
      _
    // Predicated region
    $region30: #{tpu_custom_call.1} parent=1 // pred_check
      _
    $region31: #{tpu_custom_call.1} parent=1 // pred_check_branch
      %147 = sbr.rel (0) target = $region33
    $region32: #{tpu_custom_call.1} parent=1 // pred_region
      %149 = vsyncadd [#allocation4], 0
      %s150 = sshll.u32 [#allocation3], 4
      %s151 = int_to_ptr.vmem [resolvable:$true] %s150
      %s152 = sshll.u32 %s5, 4
      %s153 = int_to_ptr.hbm [resolvable:$true] %s152
      %158 = dma.vmem_to_hbm [thread:$0]  %s151, 256, %s153, [#allocation4], 128, 128, 8
    $region33: #{tpu_custom_call.1} parent=1 // pred_fallthru
      _
    // Predicated region
    $region34: #{tpu_custom_call.1} parent=1 // pred_check
      _
    $region35: #{tpu_custom_call.1} parent=1 // pred_check_branch
      %160 = sbr.rel (0) target = $region37
    $region36: #{tpu_custom_call.1} parent=1 // pred_region
      %162 = dma.done [#allocation4], 256
    $region37: #{tpu_custom_call.1} parent=1 // pred_fallthru
      _
    %163 = vsyncpa [#allocation4], 1

</llo_original>
